<compile_context>
chip_gen: v7x
topology: tpu7x:2x2x1
jax: 0.10.0
libtpu: 0.0.40
codegen_flags: <defaults>
</compile_context>

<pallas_src>
import functools

import numpy as np
import jax
import jax.numpy as jnp
from jax.experimental import pallas as pl
from jax.experimental.pallas import tpu as pltpu


def _round_up(x, m):
    return ((x + m - 1) // m) * m


def _pow_p(x, p):
    """x ** p for x > 0 (f32). Integer p -> square-and-multiply on the VPU."""
    ip = int(round(p))
    if float(ip) == float(p) and ip >= 1:
        result = None
        base = x
        e = ip
        while e > 0:
            if e & 1:
                result = base if result is None else result * base
            e >>= 1
            if e:
                base = base * base
        return result
    # General real p goes through the EUP (one log + one exp per element).
    return jnp.exp(jnp.float32(p) * jnp.log(x))


def _root_p(m, p):
    """m ** (1/p) for m > 0. Only runs on the tiny (tm, 1) finalize tile."""
    if p == 1.0:
        return m
    if p == 2.0:
        return jnp.sqrt(m)
    return jnp.exp(jnp.log(m) * jnp.float32(1.0 / p))


def _fold_lanes(v, tl):
    """Pairwise-tree sum of lane-aligned 128-wide column chunks: (tm, tl) -> (tm, 128).

    Static, lane-aligned slices: pure VPU adds, no XLU cross-lane reduce.
    """
    chunks = [v[:, c * 128:(c + 1) * 128] for c in range(tl // 128)]
    while len(chunks) > 1:
        nxt = [chunks[i] + chunks[i + 1] for i in range(0, len(chunks) - 1, 2)]
        if len(chunks) % 2:
            nxt.append(chunks[-1])
        chunks = nxt
    return chunks[0]


def _gem_kernel_single(x_ref, o_ref, *, p, eps, L):
    """Whole reduction axis in one block: clamp -> pow -> mean -> root."""
    x = jnp.maximum(x_ref[...].astype(jnp.float32), jnp.float32(eps))
    xp = _pow_p(x, p)
    mean = jnp.sum(xp, axis=-1, keepdims=True) * jnp.float32(1.0 / L)
    o_ref[...] = _root_p(mean, p).astype(o_ref.dtype)


def _gem_kernel_multi(x_ref, o_ref, acc_ref, *, p, eps, L, tl, n_lb):
    """Tiled reduction axis: lane-wide f32 accumulator resident across axis 1."""
    l = pl.program_id(1)

    @pl.when(l == 0)
    def _():
        acc_ref[...] = jnp.zeros_like(acc_ref)

    x = jnp.maximum(x_ref[...].astype(jnp.float32), jnp.float32(eps))
    xp = _pow_p(x, p)

    rem = L % tl
    if rem == 0:
        # No ragged tail at all: never emit mask code.
        acc_ref[...] += _fold_lanes(xp, tl)
    else:
        is_last = l == n_lb - 1

        @pl.when(jnp.logical_not(is_last))
        def _():
            acc_ref[...] += _fold_lanes(xp, tl)

        @pl.when(is_last)
        def _():
            col = jax.lax.broadcasted_iota(jnp.int32, xp.shape, 1)
            masked = jnp.where(col < rem, xp, jnp.float32(0.0))
            acc_ref[...] += _fold_lanes(masked, tl)

    @pl.when(l == n_lb - 1)
    def _():
        total = jnp.sum(acc_ref[...], axis=-1, keepdims=True)   # single XLU reduce
        mean = total * jnp.float32(1.0 / L)
        o_ref[...] = _root_p(mean, p).astype(o_ref.dtype)


@functools.partial(
    jax.jit,
    static_argnames=("p", "output_size", "eps", "tm", "tl_max", "block_bytes"))
def generalized_mean_pooling(x, p=3.0, output_size=1, eps=1e-6,
                             tm=256, tl_max=None, block_bytes=4 * 1024 * 1024):
    """JAX/Pallas equivalent of GeneralizedMeanPooling(norm=p, output_size, eps).

    Accepts (..., L) and pools the last axis, matching
      x.clamp(min=eps).pow(p) -> adaptive_avg_pool1d(., output_size) -> pow(1/p)
    """
    # TODO(synk): only global pooling (output_size == 1) has a Pallas kernel;
    # general adaptive bins (output_size > 1) are not implemented.
    assert output_size == 1, "only output_size=1 (global GeM) is implemented"

    orig_shape = x.shape
    L = int(orig_shape[-1])
    M = int(np.prod(orig_shape[:-1]))
    x2 = x.reshape(M, L)                     # contiguous reshape: no copy

    itemsize = int(jnp.dtype(x.dtype).itemsize)
    row_align = 8 * max(1, 4 // itemsize)    # 8 f32 / 16 bf16 / 32 int8,fp8

    # Row tiling: cap so grid_m >= 2 whenever there is more than one sublane
    # group of rows -> both v7x TensorCores always get work.
    if M > row_align:
        tm_cap = _round_up(-(-M // 2), row_align)
    else:
        tm_cap = _round_up(M, row_align)
    tm_eff = max(row_align, min(_round_up(tm, row_align), tm_cap))
    grid_m = pl.cdiv(M, tm_eff)

    # Reduction-axis tiling: target ~block_bytes per input block (amortizes the
    # ~0.35us per-grid-step overhead, dtype-aware so bf16 keeps the same DMA
    # bytes per step). Full-width single block when L is small enough.
    if tl_max is None:
        tl_budget = max(512, (block_bytes // (tm_eff * itemsize)) // 128 * 128)
        tl_max = min(16384, tl_budget)
    if L <= tl_max:
        tl, grid_l = L, 1
    else:
        tl = max(128, (int(tl_max) // 128) * 128)
        grid_l = pl.cdiv(L, tl)

    if grid_l == 1:
        kernel = functools.partial(_gem_kernel_single,
                                   p=float(p), eps=float(eps), L=L)
        scratch = []
    else:
        kernel = functools.partial(_gem_kernel_multi,
                                   p=float(p), eps=float(eps),
                                   L=L, tl=tl, n_lb=int(grid_l))
        scratch = [pltpu.VMEM((tm_eff, 128), jnp.float32)]

    out = pl.pallas_call(
        kernel,
        out_shape=jax.ShapeDtypeStruct((M, 1), x.dtype),
        grid_spec=pltpu.PrefetchScalarGridSpec(
            num_scalar_prefetch=0,
            grid=(grid_m, grid_l),
            in_specs=[pl.BlockSpec((tm_eff, tl), lambda i, l: (i, l))],
            out_specs=pl.BlockSpec((tm_eff, 1), lambda i, l: (i, 0)),
            scratch_shapes=scratch),
        compiler_params=pltpu.CompilerParams(
            dimension_semantics=("parallel", "arbitrary"),
            vmem_limit_bytes=40 * 1024 * 1024),
    )(x2)

    return out.reshape(orig_shape[:-1] + (output_size,))


def _reference_gem(x, p=3.0, eps=1e-6):
    xf = jnp.maximum(x.astype(jnp.float32), eps) ** p
    m = jnp.mean(xf, axis=-1, keepdims=True)
    return (m ** (1.0 / p)).astype(x.dtype)


if __name__ == "__main__":
    key = jax.random.PRNGKey(0)
    k1, k2, k3 = jax.random.split(key, 3)

    # 1) Typical GeM retrieval-head shape (B, C, H*W): single-block reduction,
    #    integer-p VPU fast path.
    x = jax.random.normal(k1, (2, 256, 49), dtype=jnp.float32)
    out = jax.block_until_ready(
        generalized_mean_pooling(x, p=3.0, output_size=1, eps=1e-6))
    assert out.shape == (2, 256, 1), out.shape
    assert bool(jnp.all(jnp.isfinite(out)))
    ref = _reference_gem(x, p=3.0, eps=1e-6)
    np.testing.assert_allclose(np.asarray(out), np.asarray(ref),
                               rtol=2e-3, atol=2e-5)

    # 2) Long reduction with forced small tiles: exercises the tiled-L grid,
    #    the ragged-tail (masked last block) path and non-integer p (EUP).
    x_long = jax.random.normal(k2, (2, 16, 3000), dtype=jnp.float32)
    out_long = jax.block_until_ready(
        generalized_mean_pooling(x_long, p=4.6, output_size=1, eps=1e-8,
                                 tl_max=512))
    assert out_long.shape == (2, 16, 1), out_long.shape
    assert bool(jnp.all(jnp.isfinite(out_long)))
    ref_long = _reference_gem(x_long, p=4.6, eps=1e-8)
    np.testing.assert_allclose(np.asarray(out_long), np.asarray(ref_long),
                               rtol=2e-3, atol=2e-5)

    # 3) bf16 input: exercises dtype-aware sublane rounding, the rem == 0
    #    (mask-free) multi-block path and the p=2 sqrt finalize.
    x_bf = jax.random.normal(k3, (2, 64, 1024), dtype=jnp.bfloat16)
    out_bf = jax.block_until_ready(
        generalized_mean_pooling(x_bf, p=2.0, output_size=1, eps=1e-6,
                                 tl_max=512))
    assert out_bf.shape == (2, 64, 1), out_bf.shape
    ref_bf = _reference_gem(x_bf, p=2.0, eps=1e-6)
    np.testing.assert_allclose(np.asarray(out_bf, dtype=np.float32),
                               np.asarray(ref_bf, dtype=np.float32),
                               rtol=2e-2, atol=1e-3)

    print("KERNEL_OK")
</pallas_src>

<mosaic_0001>
module attributes {stable_mosaic.version = 11 : i64} {
  func.func @_gem_kernel_single(%arg0: i32, %arg1: i32, %arg2: memref<256x49xf32, #tpu.memory_space<vmem>>, %arg3: memref<256x1xf32, #tpu.memory_space<vmem>>) attributes {dimension_semantics = [#tpu.dimension_semantics<parallel>, #tpu.dimension_semantics<arbitrary>], iteration_bounds = array<i64: 2, 1>, scalar_prefetch = 0 : i64, scratch_operands = 0 : i64, tpu.core_type = #tpu.core_type<tc>, window_params = [{transform_indices = @transform_0, window_bounds = array<i64: 256, 49>}, {transform_indices = @transform_1, window_bounds = array<i64: 256, 1>}]} {
    %c0 = arith.constant 0 : index
    %c0_0 = arith.constant 0 : index
    %0 = vector.load %arg2[%c0, %c0_0] : memref<256x49xf32, #tpu.memory_space<vmem>>, vector<256x49xf32>
    %cst = arith.constant 9.99999997E-7 : f32
    %1 = vector.broadcast %cst : f32 to vector<256x49xf32>
    %2 = arith.maximumf %0, %1 : vector<256x49xf32>
    %3 = arith.mulf %2, %2 : vector<256x49xf32>
    %4 = arith.mulf %2, %3 : vector<256x49xf32>
    %cst_1 = arith.constant dense<0.000000e+00> : vector<256xf32>
    %5 = vector.multi_reduction <add>, %4, %cst_1 [1] : vector<256x49xf32> to vector<256xf32>
    %6 = vector.shape_cast %5 : vector<256xf32> to vector<256x1xf32>
    %cst_2 = arith.constant 0.0204081628 : f32
    %7 = vector.broadcast %cst_2 : f32 to vector<256x1xf32>
    %8 = arith.mulf %6, %7 : vector<256x1xf32>
    %9 = math.log %8 : vector<256x1xf32>
    %cst_3 = arith.constant 0.333333343 : f32
    %10 = vector.broadcast %cst_3 : f32 to vector<256x1xf32>
    %11 = arith.mulf %9, %10 : vector<256x1xf32>
    %12 = math.exp %11 : vector<256x1xf32>
    %c0_4 = arith.constant 0 : index
    %c0_5 = arith.constant 0 : index
    %13 = vector.load %arg3[%c0_4, %c0_5] : memref<256x1xf32, #tpu.memory_space<vmem>>, vector<256x1xf32>
    tpu.vector_store %arg3[%c0_4, %c0_5], %12 {strides = array<i32>} : memref<256x1xf32, #tpu.memory_space<vmem>>, vector<256x1xf32>,
    return
  }
  func.func @transform_0(%arg0: i32, %arg1: i32) -> (i32, i32) {
    %c0_i32 = arith.constant 0 : i32
    return %arg0, %arg1 : i32, i32
  }
  func.func @transform_1(%arg0: i32, %arg1: i32) -> (i32, i32) {
    %c0_i32 = arith.constant 0 : i32
    %c0_i32_0 = arith.constant 0 : i32
    return %arg0, %c0_i32 : i32, i32
  }
}

</mosaic_0001>

<llo_original>
// kernel: generalized_mean_pooling.1
$region0: #{generalized_mean_pooling.1}
  #allocation0 [shape = 'u32[]', space=smem, size = 0x4, offset = 0x4, fixed_abs, tag = 'smem constant byte address 0x4 - core index']
  #allocation1 [shape = 'u32[144,128]{1,0:T(1,128)}', space=vmem, size = 0x12000, scoped, tag = 'internal scratch']
  %s0 = inlined_call_operand.vmem [shape: f32[512,49], index: 0, kind: input, shape index: {}]
  %s1 = inlined_call_operand.vmem [shape: f32[512,1], index: 1, kind: output, shape index: {}]
  %s2 = sld [smem:[#allocation0]]
  $region37: #{generalized_mean_pooling.1} parent=0
    _
  %s4 = ssub.s32 1, %s2
  %s5 = scalar_select 0, %s4, %s2
  loop: start=0, step=1, limit=4
  $region2: #{generalized_mean_pooling.1} parent=0 // loop_pre_header
    _
  $region3: #{generalized_mean_pooling.1} parent=0 // loop_header
    %s7 = sphi 0, %s11
    %p8 = scmp.ge.s32.totalorder %s7, 4
    %s14 = sphi 0, %s26
    %s15 = sphi 0, %s22
    %s16 = sphi 0, %s14
    %s17 = sphi 0, %s15
    %s18 = sphi 0, %s16
    %s19 = sphi 0, %s17
    %s31 = sphi 0, %s33
    %s34 = sphi 0, %s31
    %s35 = sphi 0, %s34
    %s51 = sphi 0, %s35
    %s57 = sphi 0, %s59
    %s60 = sphi 0, %s57
    %s61 = sphi 0, %s60
    %s77 = sphi 0, %s61
  $region4: #{generalized_mean_pooling.1} parent=0 // loop_header_branch
    %10 = sbr.rel (%p8) target = $region8
  $region5: #{generalized_mean_pooling.1} parent=0 // loop_body
    %s12 = ssub.s32 %s7, 1
    %s13 = ssub.s32 %s7, 2
    %s20 = sadd.s32 1, %s15
    %p21 = scmp.ge.s32.totalorder %s20, 1
    %s22 = scalar_select %p21, 0, %s20
    %s23 = sadd.s32 1, %s14
    %s24 = scalar_select %p21, %s23, %s14
    %p25 = scmp.ge.s32.totalorder %s24, 2
    %s26 = scalar_select %p25, 0, %s24
    %s27 = ssub.s32 %s14, %s26
    %s28 = ssub.s32 %s15, %s22
    %s29 = sor.u32 %s27, %s28
    %p30 = scmp.eq.s32.totalorder %s29, 0
    %s32 = sadd.s32 %s31, 1
    %s33 = scalar_select %p30, %s31, %s32
    %p36 = pneg %p30
    %p37 = scmp.eq.s32.totalorder %s7, 1
    %p38 = por %p36, %p37
    %p39 = scmp.ne.s32.totalorder %s31, %s34
    %p40 = scmp.eq.s32.totalorder %s7, 0
    %p41 = por %p39, %p40
    %p42 = scmp.ne.s32.totalorder %s31, %s34
    %p43 = scmp.eq.s32.totalorder %s12, 1
    %p44 = por %p42, %p43
    %p45 = scmp.ne.s32.totalorder %s34, %s35
    %p46 = scmp.eq.s32.totalorder %s12, 0
    %p47 = por %p45, %p46
    %p48 = scmp.ne.s32.totalorder %s34, %s35
    %p49 = scmp.eq.s32.totalorder %s13, 1
    %p50 = por %p48, %p49
    %p52 = scmp.ne.s32.totalorder %s35, %s51
    %p53 = scmp.eq.s32.totalorder %s13, 0
    %p54 = por %p52, %p53
    %s55 = ssub.s32 %s14, %s26
    %p56 = scmp.eq.s32.totalorder %s55, 0
    %s58 = sadd.s32 %s57, 1
    %s59 = scalar_select %p56, %s57, %s58
    %p62 = pneg %p56
    %p63 = scmp.eq.s32.totalorder %s7, 1
    %p64 = por %p62, %p63
    %p65 = scmp.ne.s32.totalorder %s57, %s60
    %p66 = scmp.eq.s32.totalorder %s7, 0
    %p67 = por %p65, %p66
    %p68 = scmp.ne.s32.totalorder %s57, %s60
    %p69 = scmp.eq.s32.totalorder %s12, 1
    %p70 = por %p68, %p69
    %p71 = scmp.ne.s32.totalorder %s60, %s61
    %p72 = scmp.eq.s32.totalorder %s12, 0
    %p73 = por %p71, %p72
    %p74 = scmp.ne.s32.totalorder %s60, %s61
    %p75 = scmp.eq.s32.totalorder %s13, 1
    %p76 = por %p74, %p75
    %p78 = scmp.ne.s32.totalorder %s61, %s77
    %p79 = scmp.eq.s32.totalorder %s13, 0
    %p80 = por %p78, %p79
    %p81 = scmp.le.s32.totalorder 1, %s7
    %p82 = scmp.lt.s32.totalorder %s7, 3
    %p83 = pnand %p81, %p82
    %p84 = pneg %p83
    // Predicated region
    $region9: #{generalized_mean_pooling.1} parent=5 // pred_check
      _
    $region10: #{generalized_mean_pooling.1} parent=5 // pred_check_branch
      %86 = sbr.rel (%p83) target = $region12
    $region11: #{generalized_mean_pooling.1} parent=5 // pred_region
      %s87 = ssub.s32 %s7, 1
    $region12: #{generalized_mean_pooling.1} parent=5 // pred_fallthru
      _
    %p88 = scmp.lt.s32.totalorder %s7, 2
    // Predicated region
    $region13: #{generalized_mean_pooling.1} parent=5 // pred_check
      %p89 = pneg %p88
    $region14: #{generalized_mean_pooling.1} parent=5 // pred_check_branch
      %91 = sbr.rel (%p89) target = $region16
    $region15: #{generalized_mean_pooling.1} parent=5 // pred_region
      // Predicated region
      $region17: #{generalized_mean_pooling.1} parent=15 // pred_check
        %p92 = pneg %p41
      $region18: #{generalized_mean_pooling.1} parent=15 // pred_check_branch
        %94 = sbr.rel (%p92) target = $region20
      $region19: #{generalized_mean_pooling.1} parent=15 // pred_region
        %s95 = smul.u32 32, %s14
        %p96 = scmp.lt.s32.totalorder %s95, 63
        %s97 = scalar_select %p96, %s95, 63
        %p98 = scmp.lt.s32.totalorder %s15, 0
        %s99 = scalar_select %p98, %s15, 0
        %s100 = sadd.s32 %s99, %s97
        %s101 = smul.addr %s100, 8
        %s102 = scalar_lea.vmem %s0, %s101
        %s103 = smul.u32 32, %s14
      $region20: #{generalized_mean_pooling.1} parent=15 // pred_fallthru
        _
    $region16: #{generalized_mean_pooling.1} parent=5 // pred_fallthru
      _
    %p104 = scmp.le.s32.totalorder 1, %s7
    %p105 = scmp.lt.s32.totalorder %s7, 3
    %p106 = pnand %p104, %p105
    %p107 = pneg %p106
    // Predicated region
    $region21: #{generalized_mean_pooling.1} parent=5 // pred_check
      _
    $region22: #{generalized_mean_pooling.1} parent=5 // pred_check_branch
      %109 = sbr.rel (%p106) target = $region24
    $region23: #{generalized_mean_pooling.1} parent=5 // pred_region
      %s110 = ssub.s32 %s7, 1
      %s111 = smul.u32 32, %s16
      %p112 = scmp.lt.s32.totalorder %s111, 63
      %s113 = scalar_select %p112, %s111, 63
      %p114 = scmp.lt.s32.totalorder %s17, 0
      %s115 = scalar_select %p114, %s17, 0
      %s116 = sadd.s32 %s115, %s113
      %s117 = smul.addr %s116, 8
      %s118 = scalar_lea.vmem %s0, %s117
      %p119 = pneg %p47
      %p120 = pneg %p44
      %p121 = pneg %p73
      %p122 = pneg %p70
      %s123 = smul.u32 32, %s16
      %p124 = scmp.lt.s32.totalorder %s123, 63
      %s125 = scalar_select %p124, %s123, 63
      %s126 = smul.addr %s125, 8
      %s127 = scalar_lea.vmem %s1, %s126
      %s128 = smul.u32 32, %s16
      %p129 = scmp.lt.s32.totalorder %s128, 63
      %s130 = scalar_select %p129, %s128, 63
      %p131 = scmp.lt.s32.totalorder %s17, 0
      %s132 = scalar_select %p131, %s17, 0
      %s133 = sadd.s32 %s132, %s130
      %s134 = smul.addr %s133, 8
      %s135 = scalar_lea.vmem %s0, %s134
      %s136 = smul.u32 32, %s16
      %s137 = smul.u32 32, %s16
      %p138 = scmp.lt.s32.totalorder %s137, 63
      %s139 = scalar_select %p138, %s137, 63
      %s140 = smul.addr %s139, 8
      %s141 = scalar_lea.vmem %s1, %s140
      %s142 = smul.u32 32, %s16
      %v143 = vld [vmem:[%s135] sm:$0xff]
      %v144 = vld [vmem:[%s135 + $0x8] sm:$0xff]
      %v145 = vld [vmem:[%s135 + $0x10] sm:$0xff]
      %v146 = vld [vmem:[%s135 + $0x18] sm:$0xff]
      %v147 = vld [vmem:[%s135 + $0x20] sm:$0xff]
      %v148 = vld [vmem:[%s135 + $0x28] sm:$0xff]
      %v149 = vld [vmem:[%s135 + $0x30] sm:$0xff]
      %v150 = vld [vmem:[%s135 + $0x38] sm:$0xff]
      %v151 = vld [vmem:[%s135 + $0x40] sm:$0xff]
      %v152 = vld [vmem:[%s135 + $0x48] sm:$0xff]
      %v153 = vld [vmem:[%s135 + $0x50] sm:$0xff]
      %v154 = vld [vmem:[%s135 + $0x58] sm:$0xff]
      %v155 = vld [vmem:[%s135 + $0x60] sm:$0xff]
      %v156 = vld [vmem:[%s135 + $0x68] sm:$0xff]
      %v157 = vld [vmem:[%s135 + $0x70] sm:$0xff]
      %v158 = vld [vmem:[%s135 + $0x78] sm:$0xff]
      %v159 = vld [vmem:[%s135 + $0x80] sm:$0xff]
      %v160 = vld [vmem:[%s135 + $0x88] sm:$0xff]
      %v161 = vld [vmem:[%s135 + $0x90] sm:$0xff]
      %v162 = vld [vmem:[%s135 + $0x98] sm:$0xff]
      %v163 = vld [vmem:[%s135 + $0xa0] sm:$0xff]
      %v164 = vld [vmem:[%s135 + $0xa8] sm:$0xff]
      %v165 = vld [vmem:[%s135 + $0xb0] sm:$0xff]
      %v166 = vld [vmem:[%s135 + $0xb8] sm:$0xff]
      %v167 = vld [vmem:[%s135 + $0xc0] sm:$0xff]
      %v168 = vld [vmem:[%s135 + $0xc8] sm:$0xff]
      %v169 = vld [vmem:[%s135 + $0xd0] sm:$0xff]
      %v170 = vld [vmem:[%s135 + $0xd8] sm:$0xff]
      %v171 = vld [vmem:[%s135 + $0xe0] sm:$0xff]
      %v172 = vld [vmem:[%s135 + $0xe8] sm:$0xff]
      %v173 = vld [vmem:[%s135 + $0xf0] sm:$0xff]
      %v174 = vld [vmem:[%s135 + $0xf8] sm:$0xff]
      %v175 = vmax.f32 %v143, 1e-06
      %v176 = vmax.f32 %v144, 1e-06
      %v177 = vmax.f32 %v145, 1e-06
      %v178 = vmax.f32 %v146, 1e-06
      %v179 = vmax.f32 %v147, 1e-06
      %v180 = vmax.f32 %v148, 1e-06
      %v181 = vmax.f32 %v149, 1e-06
      %v182 = vmax.f32 %v150, 1e-06
      %v183 = vmax.f32 %v151, 1e-06
      %v184 = vmax.f32 %v152, 1e-06
      %v185 = vmax.f32 %v153, 1e-06
      %v186 = vmax.f32 %v154, 1e-06
      %v187 = vmax.f32 %v155, 1e-06
      %v188 = vmax.f32 %v156, 1e-06
      %v189 = vmax.f32 %v157, 1e-06
      %v190 = vmax.f32 %v158, 1e-06
      %v191 = vmax.f32 %v159, 1e-06
      %v192 = vmax.f32 %v160, 1e-06
      %v193 = vmax.f32 %v161, 1e-06
      %v194 = vmax.f32 %v162, 1e-06
      %v195 = vmax.f32 %v163, 1e-06
      %v196 = vmax.f32 %v164, 1e-06
      %v197 = vmax.f32 %v165, 1e-06
      %v198 = vmax.f32 %v166, 1e-06
      %v199 = vmax.f32 %v167, 1e-06
      %v200 = vmax.f32 %v168, 1e-06
      %v201 = vmax.f32 %v169, 1e-06
      %v202 = vmax.f32 %v170, 1e-06
      %v203 = vmax.f32 %v171, 1e-06
      %v204 = vmax.f32 %v172, 1e-06
      %v205 = vmax.f32 %v173, 1e-06
      %v206 = vmax.f32 %v174, 1e-06
      %v207 = vmul.f32 %v175, %v175
      %v208 = vmul.f32 %v176, %v176
      %v209 = vmul.f32 %v177, %v177
      %v210 = vmul.f32 %v178, %v178
      %v211 = vmul.f32 %v179, %v179
      %v212 = vmul.f32 %v180, %v180
      %v213 = vmul.f32 %v181, %v181
      %v214 = vmul.f32 %v182, %v182
      %v215 = vmul.f32 %v183, %v183
      %v216 = vmul.f32 %v184, %v184
      %v217 = vmul.f32 %v185, %v185
      %v218 = vmul.f32 %v186, %v186
      %v219 = vmul.f32 %v187, %v187
      %v220 = vmul.f32 %v188, %v188
      %v221 = vmul.f32 %v189, %v189
      %v222 = vmul.f32 %v190, %v190
      %v223 = vmul.f32 %v191, %v191
      %v224 = vmul.f32 %v192, %v192
      %v225 = vmul.f32 %v193, %v193
      %v226 = vmul.f32 %v194, %v194
      %v227 = vmul.f32 %v195, %v195
      %v228 = vmul.f32 %v196, %v196
      %v229 = vmul.f32 %v197, %v197
      %v230 = vmul.f32 %v198, %v198
      %v231 = vmul.f32 %v199, %v199
      %v232 = vmul.f32 %v200, %v200
      %v233 = vmul.f32 %v201, %v201
      %v234 = vmul.f32 %v202, %v202
      %v235 = vmul.f32 %v203, %v203
      %v236 = vmul.f32 %v204, %v204
      %v237 = vmul.f32 %v205, %v205
      %v238 = vmul.f32 %v206, %v206
      %v239 = vmul.f32 %v175, %v207
      %v240 = vmul.f32 %v176, %v208
      %v241 = vmul.f32 %v177, %v209
      %v242 = vmul.f32 %v178, %v210
      %v243 = vmul.f32 %v179, %v211
      %v244 = vmul.f32 %v180, %v212
      %v245 = vmul.f32 %v181, %v213
      %v246 = vmul.f32 %v182, %v214
      %v247 = vmul.f32 %v183, %v215
      %v248 = vmul.f32 %v184, %v216
      %v249 = vmul.f32 %v185, %v217
      %v250 = vmul.f32 %v186, %v218
      %v251 = vmul.f32 %v187, %v219
      %v252 = vmul.f32 %v188, %v220
      %v253 = vmul.f32 %v189, %v221
      %v254 = vmul.f32 %v190, %v222
      %v255 = vmul.f32 %v191, %v223
      %v256 = vmul.f32 %v192, %v224
      %v257 = vmul.f32 %v193, %v225
      %v258 = vmul.f32 %v194, %v226
      %v259 = vmul.f32 %v195, %v227
      %v260 = vmul.f32 %v196, %v228
      %v261 = vmul.f32 %v197, %v229
      %v262 = vmul.f32 %v198, %v230
      %v263 = vmul.f32 %v199, %v231
      %v264 = vmul.f32 %v200, %v232
      %v265 = vmul.f32 %v201, %v233
      %v266 = vmul.f32 %v202, %v234
      %v267 = vmul.f32 %v203, %v235
      %v268 = vmul.f32 %v204, %v236
      %v269 = vmul.f32 %v205, %v237
      %v270 = vmul.f32 %v206, %v238
      %vm271 = vcmask 400384
      %v272 = vsel %vm271, %v239, 0.0
      %273 = vadd.xlane.f32.xlu0 %v272
      %v274 = vpop.xlane.xlu0 %273
      %v275 = vsel %vm271, %v240, 0.0
      %276 = vadd.xlane.f32.xlu0 %v275
      %v277 = vpop.xlane.xlu0 %276
      %v278 = vsel %vm271, %v241, 0.0
      %279 = vadd.xlane.f32.xlu0 %v278
      %v280 = vpop.xlane.xlu0 %279
      %v281 = vsel %vm271, %v242, 0.0
      %282 = vadd.xlane.f32.xlu0 %v281
      %v283 = vpop.xlane.xlu0 %282
      %v284 = vsel %vm271, %v243, 0.0
      %285 = vadd.xlane.f32.xlu0 %v284
      %v286 = vpop.xlane.xlu0 %285
      %v287 = vsel %vm271, %v244, 0.0
      %288 = vadd.xlane.f32.xlu0 %v287
      %v289 = vpop.xlane.xlu0 %288
      %v290 = vsel %vm271, %v245, 0.0
      %291 = vadd.xlane.f32.xlu0 %v290
      %v292 = vpop.xlane.xlu0 %291
      %v293 = vsel %vm271, %v246, 0.0
      %294 = vadd.xlane.f32.xlu0 %v293
      %v295 = vpop.xlane.xlu0 %294
      %v296 = vsel %vm271, %v247, 0.0
      %297 = vadd.xlane.f32.xlu0 %v296
      %v298 = vpop.xlane.xlu0 %297
      %v299 = vsel %vm271, %v248, 0.0
      %300 = vadd.xlane.f32.xlu0 %v299
      %v301 = vpop.xlane.xlu0 %300
      %v302 = vsel %vm271, %v249, 0.0
      %303 = vadd.xlane.f32.xlu0 %v302
      %v304 = vpop.xlane.xlu0 %303
      %v305 = vsel %vm271, %v250, 0.0
      %306 = vadd.xlane.f32.xlu0 %v305
      %v307 = vpop.xlane.xlu0 %306
      %v308 = vsel %vm271, %v251, 0.0
      %309 = vadd.xlane.f32.xlu0 %v308
      %v310 = vpop.xlane.xlu0 %309
      %v311 = vsel %vm271, %v252, 0.0
      %312 = vadd.xlane.f32.xlu0 %v311
      %v313 = vpop.xlane.xlu0 %312
      %v314 = vsel %vm271, %v253, 0.0
      %315 = vadd.xlane.f32.xlu0 %v314
      %v316 = vpop.xlane.xlu0 %315
      %v317 = vsel %vm271, %v254, 0.0
      %318 = vadd.xlane.f32.xlu0 %v317
      %v319 = vpop.xlane.xlu0 %318
      %v320 = vsel %vm271, %v255, 0.0
      %321 = vadd.xlane.f32.xlu0 %v320
      %v322 = vpop.xlane.xlu0 %321
      %v323 = vsel %vm271, %v256, 0.0
      %324 = vadd.xlane.f32.xlu0 %v323
      %v325 = vpop.xlane.xlu0 %324
      %v326 = vsel %vm271, %v257, 0.0
      %327 = vadd.xlane.f32.xlu0 %v326
      %v328 = vpop.xlane.xlu0 %327
      %v329 = vsel %vm271, %v258, 0.0
      %330 = vadd.xlane.f32.xlu0 %v329
      %v331 = vpop.xlane.xlu0 %330
      %v332 = vsel %vm271, %v259, 0.0
      %333 = vadd.xlane.f32.xlu0 %v332
      %v334 = vpop.xlane.xlu0 %333
      %v335 = vsel %vm271, %v260, 0.0
      %336 = vadd.xlane.f32.xlu0 %v335
      %v337 = vpop.xlane.xlu0 %336
      %v338 = vsel %vm271, %v261, 0.0
      %339 = vadd.xlane.f32.xlu0 %v338
      %v340 = vpop.xlane.xlu0 %339
      %v341 = vsel %vm271, %v262, 0.0
      %342 = vadd.xlane.f32.xlu0 %v341
      %v343 = vpop.xlane.xlu0 %342
      %v344 = vsel %vm271, %v263, 0.0
      %345 = vadd.xlane.f32.xlu0 %v344
      %v346 = vpop.xlane.xlu0 %345
      %v347 = vsel %vm271, %v264, 0.0
      %348 = vadd.xlane.f32.xlu0 %v347
      %v349 = vpop.xlane.xlu0 %348
      %v350 = vsel %vm271, %v265, 0.0
      %351 = vadd.xlane.f32.xlu0 %v350
      %v352 = vpop.xlane.xlu0 %351
      %v353 = vsel %vm271, %v266, 0.0
      %354 = vadd.xlane.f32.xlu0 %v353
      %v355 = vpop.xlane.xlu0 %354
      %v356 = vsel %vm271, %v267, 0.0
      %357 = vadd.xlane.f32.xlu0 %v356
      %v358 = vpop.xlane.xlu0 %357
      %v359 = vsel %vm271, %v268, 0.0
      %360 = vadd.xlane.f32.xlu0 %v359
      %v361 = vpop.xlane.xlu0 %360
      %v362 = vsel %vm271, %v269, 0.0
      %363 = vadd.xlane.f32.xlu0 %v362
      %v364 = vpop.xlane.xlu0 %363
      %v365 = vsel %vm271, %v270, 0.0
      %366 = vadd.xlane.f32.xlu0 %v365
      %v367 = vpop.xlane.xlu0 %366
      %v368 = vmul.f32 %v274, 0.020408163
      %v369 = vmul.f32 %v277, 0.020408163
      %v370 = vmul.f32 %v280, 0.020408163
      %v371 = vmul.f32 %v283, 0.020408163
      %v372 = vmul.f32 %v286, 0.020408163
      %v373 = vmul.f32 %v289, 0.020408163
      %v374 = vmul.f32 %v292, 0.020408163
      %v375 = vmul.f32 %v295, 0.020408163
      %v376 = vmul.f32 %v298, 0.020408163
      %v377 = vmul.f32 %v301, 0.020408163
      %v378 = vmul.f32 %v304, 0.020408163
      %v379 = vmul.f32 %v307, 0.020408163
      %v380 = vmul.f32 %v310, 0.020408163
      %v381 = vmul.f32 %v313, 0.020408163
      %v382 = vmul.f32 %v316, 0.020408163
      %v383 = vmul.f32 %v319, 0.020408163
      %v384 = vmul.f32 %v322, 0.020408163
      %v385 = vmul.f32 %v325, 0.020408163
      %v386 = vmul.f32 %v328, 0.020408163
      %v387 = vmul.f32 %v331, 0.020408163
      %v388 = vmul.f32 %v334, 0.020408163
      %v389 = vmul.f32 %v337, 0.020408163
      %v390 = vmul.f32 %v340, 0.020408163
      %v391 = vmul.f32 %v343, 0.020408163
      %v392 = vmul.f32 %v346, 0.020408163
      %v393 = vmul.f32 %v349, 0.020408163
      %v394 = vmul.f32 %v352, 0.020408163
      %v395 = vmul.f32 %v355, 0.020408163
      %v396 = vmul.f32 %v358, 0.020408163
      %v397 = vmul.f32 %v361, 0.020408163
      %v398 = vmul.f32 %v364, 0.020408163
      %v399 = vmul.f32 %v367, 0.020408163
      %v400 = vlog2.pop %v368
      %v401 = vmul.f32 %v400, 0.6931472
      %v402 = vlog2.pop %v369
      %v403 = vmul.f32 %v402, 0.6931472
      %v404 = vlog2.pop %v370
      %v405 = vmul.f32 %v404, 0.6931472
      %v406 = vlog2.pop %v371
      %v407 = vmul.f32 %v406, 0.6931472
      %v408 = vlog2.pop %v372
      %v409 = vmul.f32 %v408, 0.6931472
      %v410 = vlog2.pop %v373
      %v411 = vmul.f32 %v410, 0.6931472
      %v412 = vlog2.pop %v374
      %v413 = vmul.f32 %v412, 0.6931472
      %v414 = vlog2.pop %v375
      %v415 = vmul.f32 %v414, 0.6931472
      %v416 = vlog2.pop %v376
      %v417 = vmul.f32 %v416, 0.6931472
      %v418 = vlog2.pop %v377
      %v419 = vmul.f32 %v418, 0.6931472
      %v420 = vlog2.pop %v378
      %v421 = vmul.f32 %v420, 0.6931472
      %v422 = vlog2.pop %v379
      %v423 = vmul.f32 %v422, 0.6931472
      %v424 = vlog2.pop %v380
      %v425 = vmul.f32 %v424, 0.6931472
      %v426 = vlog2.pop %v381
      %v427 = vmul.f32 %v426, 0.6931472
      %v428 = vlog2.pop %v382
      %v429 = vmul.f32 %v428, 0.6931472
      %v430 = vlog2.pop %v383
      %v431 = vmul.f32 %v430, 0.6931472
      %v432 = vlog2.pop %v384
      %v433 = vmul.f32 %v432, 0.6931472
      %v434 = vlog2.pop %v385
      %v435 = vmul.f32 %v434, 0.6931472
      %v436 = vlog2.pop %v386
      %v437 = vmul.f32 %v436, 0.6931472
      %v438 = vlog2.pop %v387
      %v439 = vmul.f32 %v438, 0.6931472
      %v440 = vlog2.pop %v388
      %v441 = vmul.f32 %v440, 0.6931472
      %v442 = vlog2.pop %v389
      %v443 = vmul.f32 %v442, 0.6931472
      %v444 = vlog2.pop %v390
      %v445 = vmul.f32 %v444, 0.6931472
      %v446 = vlog2.pop %v391
      %v447 = vmul.f32 %v446, 0.6931472
      %v448 = vlog2.pop %v392
      %v449 = vmul.f32 %v448, 0.6931472
      %v450 = vlog2.pop %v393
      %v451 = vmul.f32 %v450, 0.6931472
      %v452 = vlog2.pop %v394
      %v453 = vmul.f32 %v452, 0.6931472
      %v454 = vlog2.pop %v395
      %v455 = vmul.f32 %v454, 0.6931472
      %v456 = vlog2.pop %v396
      %v457 = vmul.f32 %v456, 0.6931472
      %v458 = vlog2.pop %v397
      %v459 = vmul.f32 %v458, 0.6931472
      %v460 = vlog2.pop %v398
      %v461 = vmul.f32 %v460, 0.6931472
      %v462 = vlog2.pop %v399
      %v463 = vmul.f32 %v462, 0.6931472
      %v464 = vmul.f32 %v401, 0.33333334
      %v465 = vmul.f32 %v403, 0.33333334
      %v466 = vmul.f32 %v405, 0.33333334
      %v467 = vmul.f32 %v407, 0.33333334
      %v468 = vmul.f32 %v409, 0.33333334
      %v469 = vmul.f32 %v411, 0.33333334
      %v470 = vmul.f32 %v413, 0.33333334
      %v471 = vmul.f32 %v415, 0.33333334
      %v472 = vmul.f32 %v417, 0.33333334
      %v473 = vmul.f32 %v419, 0.33333334
      %v474 = vmul.f32 %v421, 0.33333334
      %v475 = vmul.f32 %v423, 0.33333334
      %v476 = vmul.f32 %v425, 0.33333334
      %v477 = vmul.f32 %v427, 0.33333334
      %v478 = vmul.f32 %v429, 0.33333334
      %v479 = vmul.f32 %v431, 0.33333334
      %v480 = vmul.f32 %v433, 0.33333334
      %v481 = vmul.f32 %v435, 0.33333334
      %v482 = vmul.f32 %v437, 0.33333334
      %v483 = vmul.f32 %v439, 0.33333334
      %v484 = vmul.f32 %v441, 0.33333334
      %v485 = vmul.f32 %v443, 0.33333334
      %v486 = vmul.f32 %v445, 0.33333334
      %v487 = vmul.f32 %v447, 0.33333334
      %v488 = vmul.f32 %v449, 0.33333334
      %v489 = vmul.f32 %v451, 0.33333334
      %v490 = vmul.f32 %v453, 0.33333334
      %v491 = vmul.f32 %v455, 0.33333334
      %v492 = vmul.f32 %v457, 0.33333334
      %v493 = vmul.f32 %v459, 0.33333334
      %v494 = vmul.f32 %v461, 0.33333334
      %v495 = vmul.f32 %v463, 0.33333334
      %v496 = vmul.f32 %v464, 1.442695
      %v497 = vpow.pop %v496
      %v498 = vmul.f32 %v465, 1.442695
      %v499 = vpow.pop %v498
      %v500 = vmul.f32 %v466, 1.442695
      %v501 = vpow.pop %v500
      %v502 = vmul.f32 %v467, 1.442695
      %v503 = vpow.pop %v502
      %v504 = vmul.f32 %v468, 1.442695
      %v505 = vpow.pop %v504
      %v506 = vmul.f32 %v469, 1.442695
      %v507 = vpow.pop %v506
      %v508 = vmul.f32 %v470, 1.442695
      %v509 = vpow.pop %v508
      %v510 = vmul.f32 %v471, 1.442695
      %v511 = vpow.pop %v510
      %v512 = vmul.f32 %v472, 1.442695
      %v513 = vpow.pop %v512
      %v514 = vmul.f32 %v473, 1.442695
      %v515 = vpow.pop %v514
      %v516 = vmul.f32 %v474, 1.442695
      %v517 = vpow.pop %v516
      %v518 = vmul.f32 %v475, 1.442695
      %v519 = vpow.pop %v518
      %v520 = vmul.f32 %v476, 1.442695
      %v521 = vpow.pop %v520
      %v522 = vmul.f32 %v477, 1.442695
      %v523 = vpow.pop %v522
      %v524 = vmul.f32 %v478, 1.442695
      %v525 = vpow.pop %v524
      %v526 = vmul.f32 %v479, 1.442695
      %v527 = vpow.pop %v526
      %v528 = vmul.f32 %v480, 1.442695
      %v529 = vpow.pop %v528
      %v530 = vmul.f32 %v481, 1.442695
      %v531 = vpow.pop %v530
      %v532 = vmul.f32 %v482, 1.442695
      %v533 = vpow.pop %v532
      %v534 = vmul.f32 %v483, 1.442695
      %v535 = vpow.pop %v534
      %v536 = vmul.f32 %v484, 1.442695
      %v537 = vpow.pop %v536
      %v538 = vmul.f32 %v485, 1.442695
      %v539 = vpow.pop %v538
      %v540 = vmul.f32 %v486, 1.442695
      %v541 = vpow.pop %v540
      %v542 = vmul.f32 %v487, 1.442695
      %v543 = vpow.pop %v542
      %v544 = vmul.f32 %v488, 1.442695
      %v545 = vpow.pop %v544
      %v546 = vmul.f32 %v489, 1.442695
      %v547 = vpow.pop %v546
      %v548 = vmul.f32 %v490, 1.442695
      %v549 = vpow.pop %v548
      %v550 = vmul.f32 %v491, 1.442695
      %v551 = vpow.pop %v550
      %v552 = vmul.f32 %v492, 1.442695
      %v553 = vpow.pop %v552
      %v554 = vmul.f32 %v493, 1.442695
      %v555 = vpow.pop %v554
      %v556 = vmul.f32 %v494, 1.442695
      %v557 = vpow.pop %v556
      %v558 = vmul.f32 %v495, 1.442695
      %v559 = vpow.pop %v558
      %vm560 = vcmask 7168
      %561 = vst.msk [vmem:[%s141] sm:$0xff] %vm560, %v497
      %562 = vst.msk [vmem:[%s141 + $0x8] sm:$0xff] %vm560, %v499
      %563 = vst.msk [vmem:[%s141 + $0x10] sm:$0xff] %vm560, %v501
      %564 = vst.msk [vmem:[%s141 + $0x18] sm:$0xff] %vm560, %v503
      %565 = vst.msk [vmem:[%s141 + $0x20] sm:$0xff] %vm560, %v505
      %566 = vst.msk [vmem:[%s141 + $0x28] sm:$0xff] %vm560, %v507
      %567 = vst.msk [vmem:[%s141 + $0x30] sm:$0xff] %vm560, %v509
      %568 = vst.msk [vmem:[%s141 + $0x38] sm:$0xff] %vm560, %v511
      %569 = vst.msk [vmem:[%s141 + $0x40] sm:$0xff] %vm560, %v513
      %570 = vst.msk [vmem:[%s141 + $0x48] sm:$0xff] %vm560, %v515
      %571 = vst.msk [vmem:[%s141 + $0x50] sm:$0xff] %vm560, %v517
      %572 = vst.msk [vmem:[%s141 + $0x58] sm:$0xff] %vm560, %v519
      %573 = vst.msk [vmem:[%s141 + $0x60] sm:$0xff] %vm560, %v521
      %574 = vst.msk [vmem:[%s141 + $0x68] sm:$0xff] %vm560, %v523
      %575 = vst.msk [vmem:[%s141 + $0x70] sm:$0xff] %vm560, %v525
      %576 = vst.msk [vmem:[%s141 + $0x78] sm:$0xff] %vm560, %v527
      %577 = vst.msk [vmem:[%s141 + $0x80] sm:$0xff] %vm560, %v529
      %578 = vst.msk [vmem:[%s141 + $0x88] sm:$0xff] %vm560, %v531
      %579 = vst.msk [vmem:[%s141 + $0x90] sm:$0xff] %vm560, %v533
      %580 = vst.msk [vmem:[%s141 + $0x98] sm:$0xff] %vm560, %v535
      %581 = vst.msk [vmem:[%s141 + $0xa0] sm:$0xff] %vm560, %v537
      %582 = vst.msk [vmem:[%s141 + $0xa8] sm:$0xff] %vm560, %v539
      %583 = vst.msk [vmem:[%s141 + $0xb0] sm:$0xff] %vm560, %v541
      %584 = vst.msk [vmem:[%s141 + $0xb8] sm:$0xff] %vm560, %v543
      %585 = vst.msk [vmem:[%s141 + $0xc0] sm:$0xff] %vm560, %v545
      %586 = vst.msk [vmem:[%s141 + $0xc8] sm:$0xff] %vm560, %v547
      %587 = vst.msk [vmem:[%s141 + $0xd0] sm:$0xff] %vm560, %v549
      %588 = vst.msk [vmem:[%s141 + $0xd8] sm:$0xff] %vm560, %v551
      %589 = vst.msk [vmem:[%s141 + $0xe0] sm:$0xff] %vm560, %v553
      %590 = vst.msk [vmem:[%s141 + $0xe8] sm:$0xff] %vm560, %v555
      %591 = vst.msk [vmem:[%s141 + $0xf0] sm:$0xff] %vm560, %v557
      %592 = vst.msk [vmem:[%s141 + $0xf8] sm:$0xff] %vm560, %v559
      %s593 = smul.u32 32, %s16
      %p594 = scmp.lt.s32.totalorder %s593, 63
      %s595 = scalar_select %p594, %s593, 63
      %s596 = smul.addr %s595, 8
      %s597 = scalar_lea.vmem %s1, %s596
      // Predicated region
      $region25: #{generalized_mean_pooling.1} parent=23 // pred_check
        %p598 = pneg %p70
      $region26: #{generalized_mean_pooling.1} parent=23 // pred_check_branch
        %600 = sbr.rel (%p598) target = $region28
      $region27: #{generalized_mean_pooling.1} parent=23 // pred_region
        %s601 = smul.u32 32, %s16
      $region28: #{generalized_mean_pooling.1} parent=23 // pred_fallthru
        _
    $region24: #{generalized_mean_pooling.1} parent=5 // pred_fallthru
      _
    %p602 = scmp.le.s32.totalorder 2, %s7
    // Predicated region
    $region29: #{generalized_mean_pooling.1} parent=5 // pred_check
      %p603 = pneg %p602
    $region30: #{generalized_mean_pooling.1} parent=5 // pred_check_branch
      %605 = sbr.rel (%p603) target = $region32
    $region31: #{generalized_mean_pooling.1} parent=5 // pred_region
      %s606 = ssub.s32 %s7, 2
      // Predicated region
      $region33: #{generalized_mean_pooling.1} parent=31 // pred_check
        %p607 = pneg %p76
      $region34: #{generalized_mean_pooling.1} parent=31 // pred_check_branch
        %609 = sbr.rel (%p607) target = $region36
      $region35: #{generalized_mean_pooling.1} parent=31 // pred_region
        %s610 = smul.u32 32, %s18
        %p611 = scmp.lt.s32.totalorder %s610, 63
        %s612 = scalar_select %p611, %s610, 63
        %s613 = smul.addr %s612, 8
        %s614 = scalar_lea.vmem %s1, %s613
      $region36: #{generalized_mean_pooling.1} parent=31 // pred_fallthru
        _
    $region32: #{generalized_mean_pooling.1} parent=5 // pred_fallthru
      _
  $region6: #{generalized_mean_pooling.1} parent=0 // loop_footer
    %s11 = sadd.s32 1, %s7
  $region7: #{generalized_mean_pooling.1} parent=0 // loop_footer_branch
    %6 = sbr.rel target = $region3
  $region8: #{generalized_mean_pooling.1} parent=0 // loop_exit
    _

</llo_original>
